<compile_context>
chip_gen: v5e
topology: v5e:2x2
jax: 0.10.0
libtpu: 0.0.40
codegen_flags: <defaults>
</compile_context>

<pallas_src>
import jax
import jax.numpy as jnp
from jax.experimental import pallas as pl
from jax.experimental.pallas import tpu as pltpu


def _sink_cat_kernel(x_ref, o_ref):
    # x_ref: (N, 1) float32 column, o_ref: (N, 2) float32 — whole problem in VMEM.
    t = jnp.tanh(x_ref[...])                              # x3 = tanh(x)
    # x4 = log, x5 = exp collapse:  exp(log(t)) == t for t > 0 (<= 1 ulp),
    # == 0 for t == 0, NaN for t < 0 or NaN.  `t >= 0` keeps the t == 0 case exact.
    v = jnp.where(t >= 0.0, t, jnp.float32(jnp.nan))      # x5
    v = jnp.tanh(jnp.tanh(v))                             # x7, x8
    # x9 = relu is a no-op here: v >= 0 by construction and NaN propagates (torch.relu(NaN)=NaN).
    # x6 = cat([x5, x5], dim=1): both columns identical and the later ops are
    # elementwise, so they commute with the cat — emit the 2-lane output directly.
    o_ref[...] = jnp.broadcast_to(v, o_ref.shape)


@jax.jit
def model_forward(x):
    """Pallas equivalent of Model.forward: x (3,3,4) float32 -> (36, 2) float32."""
    if x.dtype != jnp.float32:
        x = x.astype(jnp.float32)
    x_col = jnp.reshape(x, (-1, 1))      # torch .view(-1, 1); contiguous bitcast
    n = x_col.shape[0]
    return pl.pallas_call(
        _sink_cat_kernel,
        out_shape=jax.ShapeDtypeStruct((n, 2), jnp.float32),
        in_specs=[pl.BlockSpec(memory_space=pltpu.MemorySpace.VMEM)],
        out_specs=pl.BlockSpec(memory_space=pltpu.MemorySpace.VMEM),
    )(x_col)


def _reference(x):
    # Literal jnp transcription of the torch forward (for a sanity check).
    x2 = jnp.reshape(x.astype(jnp.float32), (-1, 1))
    x5 = jnp.exp(jnp.log(jnp.tanh(x2)))
    x6 = jnp.concatenate([x5, x5], axis=1)
    return jnp.maximum(jnp.tanh(jnp.tanh(x6)), 0.0)


if __name__ == "__main__":
    key = jax.random.PRNGKey(0)
    x = jax.random.normal(key, (3, 3, 4), dtype=jnp.float32)

    y = model_forward(x)
    jax.block_until_ready(y)

    assert y.shape == (36, 2), y.shape
    # Both concatenated columns must be identical (cat of x5 with itself).
    same_col = (y[:, 0] == y[:, 1]) | (jnp.isnan(y[:, 0]) & jnp.isnan(y[:, 1]))
    assert bool(jnp.all(same_col))
    # Match the literal torch chain (NaN for x < 0) up to the documented <=1-ulp
    # divergence from collapsing exp(log(.)).
    y_ref = _reference(x)
    assert bool(jnp.allclose(y, y_ref, rtol=1e-5, atol=1e-5, equal_nan=True))

    print("KERNEL_OK")
</pallas_src>

<mosaic_0001>
module attributes {stable_mosaic.version = 11 : i64} {
  func.func @_sink_cat_kernel(%arg0: memref<36x1xf32, #tpu.memory_space<vmem>>, %arg1: memref<36x2xf32, #tpu.memory_space<vmem>>) attributes {dimension_semantics = [], scalar_prefetch = 0 : i64, scratch_operands = 0 : i64, tpu.core_type = #tpu.core_type<tc>} {
    %c0 = arith.constant 0 : index
    %c0_0 = arith.constant 0 : index
    %0 = vector.load %arg0[%c0, %c0_0] : memref<36x1xf32, #tpu.memory_space<vmem>>, vector<36x1xf32>
    %1 = math.tanh %0 : vector<36x1xf32>
    %cst = arith.constant 0.000000e+00 : f32
    %2 = vector.broadcast %cst : f32 to vector<36x1xf32>
    %3 = arith.cmpf oge, %1, %2 : vector<36x1xf32>
    %cst_1 = arith.constant 0x7FC00000 : f32
    %4 = vector.broadcast %cst_1 : f32 to vector<36x1xf32>
    %5 = arith.select %3, %1, %4 : vector<36x1xi1>, vector<36x1xf32>
    %6 = math.tanh %5 : vector<36x1xf32>
    %7 = math.tanh %6 : vector<36x1xf32>
    %8 = vector.shape_cast %7 : vector<36x1xf32> to vector<36x1xf32>
    %9 = vector.broadcast %8 : vector<36x1xf32> to vector<36x2xf32>
    %c0_2 = arith.constant 0 : index
    %c0_3 = arith.constant 0 : index
    %10 = vector.load %arg1[%c0_2, %c0_3] : memref<36x2xf32, #tpu.memory_space<vmem>>, vector<36x2xf32>
    tpu.vector_store %arg1[%c0_2, %c0_3], %9 {strides = array<i32>} : memref<36x2xf32, #tpu.memory_space<vmem>>, vector<36x2xf32>,
    return
  }
}

</mosaic_0001>

<llo_original>
// kernel: model_forward.1
$region0: #{model_forward.1}
  #allocation0 [shape = 'u32[]', space=smem, size = 0x4, offset = 0x4, fixed_abs, tag = 'smem constant byte address 0x4 - core index']
  #allocation1 [shape = 'u32[72,128]{1,0:T(1,128)}', space=vmem, size = 0x9000, scoped, tag = 'internal scratch']
  %s0 = inlined_call_operand.vmem [shape: f32[36,1], index: 0, kind: input, shape index: {}]
  %s1 = inlined_call_operand.vmem [shape: f32[36,2], index: 1, kind: output, shape index: {}]
  %s2 = sld [smem:[#allocation0]]
  $region14: #{model_forward.1} parent=0
    _
  %s4 = ssub.s32 1, %s2
  %s5 = scalar_select 0, %s4, %s2
  // Predicated region
  $region2: #{model_forward.1} parent=0 // pred_check
    _
  $region3: #{model_forward.1} parent=0 // pred_check_branch
    %7 = sbr.rel (0) target = $region5
  $region4: #{model_forward.1} parent=0 // pred_region
    _
  $region5: #{model_forward.1} parent=0 // pred_fallthru
    _
  %v8 = vld [vmem:[%s0] sm:$0xff]
  %v9 = vld [vmem:[%s0 + $0x8] sm:$0xff]
  %v10 = vld [vmem:[%s0 + $0x10] sm:$0xff]
  %v11 = vld [vmem:[%s0 + $0x18] sm:$0xff]
  %v12 = vld [vmem:[%s0 + $0x20] sm:$0xf]
  %v13 = vtanh.pop %v8
  %v14 = vtanh.pop %v9
  %v15 = vtanh.pop %v10
  %v16 = vtanh.pop %v11
  %v17 = vtanh.pop %v12
  %vm18 = vcmp.ge.f32.partialorder %v13, 0.0
  %vm19 = vcmp.ge.f32.partialorder %v14, 0.0
  %vm20 = vcmp.ge.f32.partialorder %v15, 0.0
  %vm21 = vcmp.ge.f32.partialorder %v16, 0.0
  %vm22 = vcmp.ge.f32.partialorder %v17, 0.0
  %v23 = vsel %vm18, %v13, nan
  %v24 = vsel %vm19, %v14, nan
  %v25 = vsel %vm20, %v15, nan
  %v26 = vsel %vm21, %v16, nan
  %v27 = vsel %vm22, %v17, nan
  %v28 = vtanh.pop %v23
  %v29 = vtanh.pop %v24
  %v30 = vtanh.pop %v25
  %v31 = vtanh.pop %v26
  %v32 = vtanh.pop %v27
  %v33 = vtanh.pop %v28
  %v34 = vtanh.pop %v29
  %v35 = vtanh.pop %v30
  %v36 = vtanh.pop %v31
  %v37 = vtanh.pop %v32
  %39 = vset.pattern.permute.xlu0 0
  %40 = vperm.xlu0 %39, %v33
  %v41 = vpop.permute.xlu0 %40
  %44 = vset.pattern.permute.xlu0 0
  %45 = vperm.xlu0 %44, %v34
  %v46 = vpop.permute.xlu0 %45
  %49 = vset.pattern.permute.xlu0 0
  %50 = vperm.xlu0 %49, %v35
  %v51 = vpop.permute.xlu0 %50
  %54 = vset.pattern.permute.xlu0 0
  %55 = vperm.xlu0 %54, %v36
  %v56 = vpop.permute.xlu0 %55
  %59 = vset.pattern.permute.xlu0 0
  %60 = vperm.xlu0 %59, %v37
  %v61 = vpop.permute.xlu0 %60
  %vm63 = vcmask 15360
  %64 = vst.msk [vmem:[%s1] sm:$0xff] %vm63, %v41
  %65 = vst.msk [vmem:[%s1 + $0x8] sm:$0xff] %vm63, %v46
  %66 = vst.msk [vmem:[%s1 + $0x10] sm:$0xff] %vm63, %v51
  %67 = vst.msk [vmem:[%s1 + $0x18] sm:$0xff] %vm63, %v56
  %vm68 = vcmask 11264
  %69 = vst.msk [vmem:[%s1 + $0x20] sm:$0xf] %vm68, %v61
  // Predicated region
  $region6: #{model_forward.1} parent=0 // pred_check
    _
  $region7: #{model_forward.1} parent=0 // pred_check_branch
    %71 = sbr.rel (0) target = $region9
  $region8: #{model_forward.1} parent=0 // pred_region
    _
  $region9: #{model_forward.1} parent=0 // pred_fallthru
    _
  // Predicated region
  $region10: #{model_forward.1} parent=0 // pred_check
    _
  $region11: #{model_forward.1} parent=0 // pred_check_branch
    %73 = sbr.rel (0) target = $region13
  $region12: #{model_forward.1} parent=0 // pred_region
    _
  $region13: #{model_forward.1} parent=0 // pred_fallthru
    _

</llo_original>
